<compile_context>
chip_gen: v7x
topology: tpu7x:2x2x1
jax: 0.10.0
libtpu: 0.0.40
codegen_flags: <defaults>
</compile_context>

<pallas_src>
import math
from functools import partial

import jax
import jax.numpy as jnp
from jax.experimental import pallas as pl
from jax.experimental.pallas import tpu as pltpu

_LANES = 128  # TPU lane width; per-head padded width inside the kernel.


def _actor_kernel(obs_ref, w1_ref, b1_ref, w2_ref, b2_ref, wh_ref, bh_ref,
                  noise_ref, out_ref, *, dim_action):
    A = dim_action
    ln2pi = math.log(2.0 * math.pi)
    tb = obs_ref.shape[0]

    # ---- MLP trunk: two Linear + ReLU layers (MXU, f32 accumulate) ---------
    x = jnp.dot(obs_ref[...], w1_ref[...], preferred_element_type=jnp.float32)
    x = jnp.maximum(x + b1_ref[...], 0.0)
    x = jnp.dot(x, w2_ref[...], preferred_element_type=jnp.float32)
    x = jnp.maximum(x + b2_ref[...], 0.0)

    # ---- fused output heads (single matmul, 2*128 wide) ---------------------
    # wh columns: [0:A] = W_mu, [A:2A] = W_mu (pre-shifted copy),
    #             [128:128+A] = W_logsig, everything else exactly 0.
    heads = jnp.dot(x, wh_ref[...], preferred_element_type=jnp.float32) + bh_ref[...]
    mu_all = heads[:, :_LANES]       # mu at lanes 0:A and A:2A, 0 elsewhere
    ls = heads[:, _LANES:]           # logsig at lanes 0:A, 0 elsewhere

    # ---- in-kernel zero-pad of noise to a full 128-lane row -----------------
    noise = jnp.concatenate(
        [noise_ref[...], jnp.zeros((tb, _LANES - A), jnp.float32)], axis=1)

    # ---- reparameterized sample + tanh squash -------------------------------
    sig = jnp.exp(ls)                # lanes >= A: exp(0) = 1
    u = mu_all + sig * noise         # lanes 0:A: u ; lanes A:2A: mu ; else 0
    a_all = jnp.tanh(u)              # lanes 0:A: a ; lanes A:2A: tanh(mu)

    # ---- log-prob (exact algebraic simplification) --------------------------
    #   (u - mu)/sig == noise   and   log(sig^2) == 2*logsig
    lane = jax.lax.broadcasted_iota(jnp.int32, (1, _LANES), 1)
    log_sig_sq = 2.0 * jnp.sum(ls, axis=1, keepdims=True)        # pad lanes give 0
    quad = jnp.sum(noise * noise, axis=1, keepdims=True)         # pad lanes give 0
    log_prob_u = -0.5 * (log_sig_sq + quad + float(A) * ln2pi)
    corr = jnp.sum(jnp.where(lane < A, jnp.log(1.0 - a_all * a_all + 1e-6), 0.0),
                   axis=1, keepdims=True)
    log_prob_a = log_prob_u - corr                                # (tb, 1)

    # ---- narrow packed output: [a | tanh(mu) | logProba] --------------------
    out_ref[...] = jnp.where(lane < 2 * A, a_all, log_prob_a)[:, :2 * A + 1]


def pack_actor_params(params):
    """Fuse + zero-pad the two head layers into one (h2, 2*128) weight/bias."""
    wmu, bmu = params["wmu"], params["bmu"]
    wls, bls = params["wls"], params["bls"]
    h2, A = wmu.shape
    assert 2 * A < _LANES, "packed output layout needs 2*dim_action < 128"
    wh = jnp.zeros((h2, 2 * _LANES), jnp.float32)
    wh = wh.at[:, 0:A].set(wmu)
    wh = wh.at[:, A:2 * A].set(wmu)
    wh = wh.at[:, _LANES:_LANES + A].set(wls)
    bh = jnp.zeros((1, 2 * _LANES), jnp.float32)
    bh = bh.at[:, 0:A].set(bmu)
    bh = bh.at[:, A:2 * A].set(bmu)
    bh = bh.at[:, _LANES:_LANES + A].set(bls)
    return {"w1": params["w1"], "b1": params["b1"],
            "w2": params["w2"], "b2": params["b2"],
            "wh": wh, "bh": bh}


def _pick_tile_b(batch, tile_b):
    """Aim for >=4 grid steps (pipelining + v7x 2-TC sharding); small batches
    get one full-array tile (block dim == array dim is always legal)."""
    if batch <= 16:
        return batch
    quarter = ((pl.cdiv(batch, 4) + 7) // 8) * 8
    return max(8, min(tile_b, quarter, batch))


def actor_net_forward(obs, packed, noise, *, tile_b=2048):
    """ActorNet forward: returns (a, logProba, tanh(mu)).

    obs:    (B, dim_obs) float32
    packed: output of pack_actor_params
    noise:  (B, dim_action) float32 standard-normal draw
    (On v5e, tile_b=1024 is the recommended cap.)
    """
    B, dim_obs = obs.shape
    A = noise.shape[1]
    h1 = packed["w1"].shape[1]
    h2 = packed["w2"].shape[1]
    n_out = 2 * A + 1

    tb = _pick_tile_b(B, tile_b)
    grid = (pl.cdiv(B, tb),)

    def row_spec(shape):      # batch-tiled arrays
        return pl.BlockSpec(shape, lambda i: (i, 0))

    def const_spec(shape):    # VMEM-resident weights / biases
        return pl.BlockSpec(shape, lambda i: (0, 0))

    cost = pl.CostEstimate(
        flops=2 * B * (dim_obs * h1 + h1 * h2 + h2 * 2 * _LANES) + 16 * B * _LANES,
        transcendentals=B * (2 * _LANES + A),
        bytes_accessed=4 * (B * (dim_obs + A + n_out)
                            + dim_obs * h1 + h1 + h1 * h2 + h2
                            + h2 * 2 * _LANES + 2 * _LANES))

    out = pl.pallas_call(
        partial(_actor_kernel, dim_action=A),
        out_shape=jax.ShapeDtypeStruct((B, n_out), jnp.float32),
        grid=grid,
        in_specs=[
            row_spec((tb, dim_obs)),           # obs
            const_spec((dim_obs, h1)),         # w1
            const_spec((1, h1)),               # b1
            const_spec((h1, h2)),              # w2
            const_spec((1, h2)),               # b2
            const_spec((h2, 2 * _LANES)),      # fused, padded head weight
            const_spec((1, 2 * _LANES)),       # fused, padded head bias
            row_spec((tb, A)),                 # noise, un-padded
        ],
        out_specs=row_spec((tb, n_out)),
        compiler_params=pltpu.CompilerParams(
            dimension_semantics=("parallel",),
            vmem_limit_bytes=32 * 1024 * 1024),
        cost_estimate=cost,
    )(obs.astype(jnp.float32),
      packed["w1"], packed["b1"], packed["w2"], packed["b2"],
      packed["wh"], packed["bh"], noise.astype(jnp.float32))

    a = out[:, :A]
    tanh_mu = out[:, A:2 * A]
    log_prob_a = out[:, 2 * A:2 * A + 1]
    return a, log_prob_a, tanh_mu


# ----------------------------- init + reference ------------------------------

def _xavier_uniform(key, fan_in, fan_out):
    limit = math.sqrt(6.0 / (fan_in + fan_out))
    return jax.random.uniform(key, (fan_in, fan_out), jnp.float32,
                              minval=-limit, maxval=limit)


def init_actor_params(key, dim_obs, dim_action, dims_hidden=(64, 64)):
    k1, k2, k3, k4 = jax.random.split(key, 4)
    h1, h2 = dims_hidden
    return {
        "w1": _xavier_uniform(k1, dim_obs, h1), "b1": jnp.zeros((1, h1), jnp.float32),
        "w2": _xavier_uniform(k2, h1, h2),      "b2": jnp.zeros((1, h2), jnp.float32),
        "wmu": _xavier_uniform(k3, h2, dim_action),
        "bmu": jnp.zeros((1, dim_action), jnp.float32),
        "wls": _xavier_uniform(k4, h2, dim_action),
        "bls": jnp.zeros((1, dim_action), jnp.float32),
    }


def actor_ref(obs, params, noise):
    """Pure-jnp reference matching the PyTorch module (f32, HIGHEST-precision
    matmuls so it is comparable to the kernel's f32 MXU accumulation)."""
    A = noise.shape[1]
    hp = jax.lax.Precision.HIGHEST
    x = jnp.maximum(jnp.dot(obs, params["w1"], precision=hp) + params["b1"], 0.0)
    x = jnp.maximum(jnp.dot(x, params["w2"], precision=hp) + params["b2"], 0.0)
    mu = jnp.dot(x, params["wmu"], precision=hp) + params["bmu"]
    sig = jnp.exp(jnp.dot(x, params["wls"], precision=hp) + params["bls"])
    u = mu + sig * noise
    a = jnp.tanh(u)
    logpu = -0.5 * (jnp.sum(jnp.log(sig ** 2), axis=1, keepdims=True)
                    + jnp.sum((u - mu) ** 2 / sig ** 2, axis=1, keepdims=True)
                    + A * math.log(2.0 * math.pi))
    logpa = logpu - jnp.sum(jnp.log(1.0 - a ** 2 + 1e-6), axis=1, keepdims=True)
    return a, logpa, jnp.tanh(mu)


if __name__ == "__main__":
    key = jax.random.PRNGKey(0)
    k_params, k_obs, k_noise, k_obs2, k_noise2 = jax.random.split(key, 5)

    dim_obs, dim_action, dims_hidden = 8, 4, (64, 64)
    params = init_actor_params(k_params, dim_obs, dim_action, dims_hidden)
    packed = pack_actor_params(params)

    fwd = jax.jit(actor_net_forward)

    # --- small-shape run (matches the module's toy usage) --------------------
    batch = 2
    obs = jax.random.normal(k_obs, (batch, dim_obs), jnp.float32)
    noise = jax.random.normal(k_noise, (batch, dim_action), jnp.float32)
    a, log_prob_a, tanh_mu = fwd(obs, packed, noise)
    jax.block_until_ready((a, log_prob_a, tanh_mu))

    assert a.shape == (batch, dim_action)
    assert log_prob_a.shape == (batch, 1)
    assert tanh_mu.shape == (batch, dim_action)

    a_r, lp_r, tm_r = actor_ref(obs, params, noise)
    assert jnp.allclose(a, a_r, atol=1e-3, rtol=1e-3)
    assert jnp.allclose(tanh_mu, tm_r, atol=1e-3, rtol=1e-3)
    assert jnp.allclose(log_prob_a, lp_r, atol=2e-3, rtol=1e-3)

    # --- larger batch: 4 grid tiles (pipelined; shards over v7x's 2 TCs) -----
    # Moderate-scale observations keep tanh(u) out of the deeply saturated
    # regime, where log(1 - a^2 + 1e-6) amplifies single-ulp f32 differences
    # in `a` by ~1e5x and any cross-implementation comparison is ill-posed.
    big = 2048
    obs2 = 0.25 * jax.random.normal(k_obs2, (big, dim_obs), jnp.float32)
    noise2 = jax.random.normal(k_noise2, (big, dim_action), jnp.float32)
    a2, lp2, tm2 = fwd(obs2, packed, noise2)
    jax.block_until_ready((a2, lp2, tm2))
    a2_r, lp2_r, tm2_r = actor_ref(obs2, params, noise2)
    assert jnp.allclose(a2, a2_r, atol=1e-3, rtol=1e-3)
    assert jnp.allclose(tm2, tm2_r, atol=1e-3, rtol=1e-3)
    assert jnp.allclose(lp2, lp2_r, atol=5e-3, rtol=2e-3)

    print("KERNEL_OK")
</pallas_src>

<mosaic_0001>
module attributes {stable_mosaic.version = 11 : i64} {
  func.func @_actor_kernel(%arg0: i32, %arg1: memref<2x8xf32, #tpu.memory_space<vmem>>, %arg2: memref<8x64xf32, #tpu.memory_space<vmem>>, %arg3: memref<1x64xf32, #tpu.memory_space<vmem>>, %arg4: memref<64x64xf32, #tpu.memory_space<vmem>>, %arg5: memref<1x64xf32, #tpu.memory_space<vmem>>, %arg6: memref<64x256xf32, #tpu.memory_space<vmem>>, %arg7: memref<1x256xf32, #tpu.memory_space<vmem>>, %arg8: memref<2x4xf32, #tpu.memory_space<vmem>>, %arg9: memref<2x9xf32, #tpu.memory_space<vmem>>) attributes {dimension_semantics = [#tpu.dimension_semantics<parallel>], iteration_bounds = array<i64: 1>, scalar_prefetch = 0 : i64, scratch_operands = 0 : i64, tpu.core_type = #tpu.core_type<tc>, window_params = [{transform_indices = @transform_0, window_bounds = array<i64: 2, 8>}, {pipeline_mode = #tpu.pipeline_mode<synchronous>, transform_indices = @transform_1, window_bounds = array<i64: 8, 64>}, {pipeline_mode = #tpu.pipeline_mode<synchronous>, transform_indices = @transform_2, window_bounds = array<i64: 1, 64>}, {pipeline_mode = #tpu.pipeline_mode<synchronous>, transform_indices = @transform_3, window_bounds = array<i64: 64, 64>}, {pipeline_mode = #tpu.pipeline_mode<synchronous>, transform_indices = @transform_4, window_bounds = array<i64: 1, 64>}, {pipeline_mode = #tpu.pipeline_mode<synchronous>, transform_indices = @transform_5, window_bounds = array<i64: 64, 256>}, {pipeline_mode = #tpu.pipeline_mode<synchronous>, transform_indices = @transform_6, window_bounds = array<i64: 1, 256>}, {transform_indices = @transform_7, window_bounds = array<i64: 2, 4>}, {transform_indices = @transform_8, window_bounds = array<i64: 2, 9>}]} {
    %c0 = arith.constant 0 : index
    %c0_0 = arith.constant 0 : index
    %0 = vector.load %arg1[%c0, %c0_0] : memref<2x8xf32, #tpu.memory_space<vmem>>, vector<2x8xf32>
    %c0_1 = arith.constant 0 : index
    %c0_2 = arith.constant 0 : index
    %1 = vector.load %arg2[%c0_1, %c0_2] : memref<8x64xf32, #tpu.memory_space<vmem>>, vector<8x64xf32>
    %cst = arith.constant dense<0.000000e+00> : vector<2x64xf32>
    %2 = tpu.matmul %0, %1, %cst {dimension_numbers = #tpu.dot_dimension_numbers<[1], [0], [0], [1], [0, 0, 1, 1], [], []>} : vector<2x8xf32>, vector<8x64xf32>, vector<2x64xf32> -> vector<2x64xf32>
    %c0_3 = arith.constant 0 : index
    %c0_4 = arith.constant 0 : index
    %3 = vector.load %arg3[%c0_3, %c0_4] : memref<1x64xf32, #tpu.memory_space<vmem>>, vector<1x64xf32>
    %4 = vector.broadcast %3 : vector<1x64xf32> to vector<2x64xf32>
    %5 = arith.addf %2, %4 : vector<2x64xf32>
    %cst_5 = arith.constant 0.000000e+00 : f32
    %6 = vector.broadcast %cst_5 : f32 to vector<2x64xf32>
    %7 = arith.maximumf %5, %6 : vector<2x64xf32>
    %c0_6 = arith.constant 0 : index
    %c0_7 = arith.constant 0 : index
    %8 = vector.load %arg4[%c0_6, %c0_7] : memref<64x64xf32, #tpu.memory_space<vmem>>, vector<64x64xf32>
    %cst_8 = arith.constant dense<0.000000e+00> : vector<2x64xf32>
    %9 = tpu.matmul %7, %8, %cst_8 {dimension_numbers = #tpu.dot_dimension_numbers<[1], [0], [0], [1], [0, 0, 1, 1], [], []>} : vector<2x64xf32>, vector<64x64xf32>, vector<2x64xf32> -> vector<2x64xf32>
    %c0_9 = arith.constant 0 : index
    %c0_10 = arith.constant 0 : index
    %10 = vector.load %arg5[%c0_9, %c0_10] : memref<1x64xf32, #tpu.memory_space<vmem>>, vector<1x64xf32>
    %11 = vector.broadcast %10 : vector<1x64xf32> to vector<2x64xf32>
    %12 = arith.addf %9, %11 : vector<2x64xf32>
    %cst_11 = arith.constant 0.000000e+00 : f32
    %13 = vector.broadcast %cst_11 : f32 to vector<2x64xf32>
    %14 = arith.maximumf %12, %13 : vector<2x64xf32>
    %c0_12 = arith.constant 0 : index
    %c0_13 = arith.constant 0 : index
    %15 = vector.load %arg6[%c0_12, %c0_13] : memref<64x256xf32, #tpu.memory_space<vmem>>, vector<64x256xf32>
    %cst_14 = arith.constant dense<0.000000e+00> : vector<2x256xf32>
    %16 = tpu.matmul %14, %15, %cst_14 {dimension_numbers = #tpu.dot_dimension_numbers<[1], [0], [0], [1], [0, 0, 1, 1], [], []>} : vector<2x64xf32>, vector<64x256xf32>, vector<2x256xf32> -> vector<2x256xf32>
    %c0_15 = arith.constant 0 : index
    %c0_16 = arith.constant 0 : index
    %17 = vector.load %arg7[%c0_15, %c0_16] : memref<1x256xf32, #tpu.memory_space<vmem>>, vector<1x256xf32>
    %18 = vector.broadcast %17 : vector<1x256xf32> to vector<2x256xf32>
    %19 = arith.addf %16, %18 : vector<2x256xf32>
    %20 = vector.extract_strided_slice %19 {offsets = [0, 0], sizes = [2, 128], strides = [1, 1]} : vector<2x256xf32> to vector<2x128xf32>
    %21 = vector.extract_strided_slice %19 {offsets = [0, 128], sizes = [2, 128], strides = [1, 1]} : vector<2x256xf32> to vector<2x128xf32>
    %c0_17 = arith.constant 0 : index
    %c0_18 = arith.constant 0 : index
    %22 = vector.load %arg8[%c0_17, %c0_18] : memref<2x4xf32, #tpu.memory_space<vmem>>, vector<2x4xf32>
    %cst_19 = arith.constant 0.000000e+00 : f32
    %23 = vector.broadcast %cst_19 : f32 to vector<2x124xf32>
    %24 = tpu.concatenate %22, %23 in 1 : vector<2x4xf32>, vector<2x124xf32> -> vector<2x128xf32>
    %25 = math.exp %21 : vector<2x128xf32>
    %26 = arith.mulf %25, %24 : vector<2x128xf32>
    %27 = arith.addf %20, %26 : vector<2x128xf32>
    %28 = math.tanh %27 : vector<2x128xf32>
    %29 = tpu.iota {dimensions = array<i32: 1>} : vector<1x128xi32>
    %cst_20 = arith.constant dense<0.000000e+00> : vector<2xf32>
    %30 = vector.multi_reduction <add>, %21, %cst_20 [1] : vector<2x128xf32> to vector<2xf32>
    %31 = vector.shape_cast %30 : vector<2xf32> to vector<2x1xf32>
    %cst_21 = arith.constant 2.000000e+00 : f32
    %32 = vector.broadcast %cst_21 : f32 to vector<2x1xf32>
    %33 = arith.mulf %32, %31 : vector<2x1xf32>
    %34 = arith.mulf %24, %24 : vector<2x128xf32>
    %cst_22 = arith.constant dense<0.000000e+00> : vector<2xf32>
    %35 = vector.multi_reduction <add>, %34, %cst_22 [1] : vector<2x128xf32> to vector<2xf32>
    %36 = vector.shape_cast %35 : vector<2xf32> to vector<2x1xf32>
    %37 = arith.addf %33, %36 : vector<2x1xf32>
    %cst_23 = arith.constant 7.35150814 : f32
    %38 = vector.broadcast %cst_23 : f32 to vector<2x1xf32>
    %39 = arith.addf %37, %38 : vector<2x1xf32>
    %cst_24 = arith.constant -5.000000e-01 : f32
    %40 = vector.broadcast %cst_24 : f32 to vector<2x1xf32>
    %41 = arith.mulf %40, %39 : vector<2x1xf32>
    %c4_i32 = arith.constant 4 : i32
    %42 = vector.broadcast %c4_i32 : i32 to vector<1x128xi32>
    %43 = arith.cmpi slt, %29, %42 : vector<1x128xi32>
    %44 = arith.mulf %28, %28 : vector<2x128xf32>
    %cst_25 = arith.constant 1.000000e+00 : f32
    %45 = vector.broadcast %cst_25 : f32 to vector<2x128xf32>
    %46 = arith.subf %45, %44 : vector<2x128xf32>
    %cst_26 = arith.constant 9.99999997E-7 : f32
    %47 = vector.broadcast %cst_26 : f32 to vector<2x128xf32>
    %48 = arith.addf %46, %47 : vector<2x128xf32>
    %49 = math.log %48 : vector<2x128xf32>
    %cst_27 = arith.constant 0.000000e+00 : f32
    %50 = vector.shape_cast %43 : vector<1x128xi1> to vector<1x128xi1>
    %51 = vector.broadcast %50 : vector<1x128xi1> to vector<2x128xi1>
    %52 = vector.broadcast %cst_27 : f32 to vector<2x128xf32>
    %53 = arith.select %51, %49, %52 : vector<2x128xi1>, vector<2x128xf32>
    %cst_28 = arith.constant dense<0.000000e+00> : vector<2xf32>
    %54 = vector.multi_reduction <add>, %53, %cst_28 [1] : vector<2x128xf32> to vector<2xf32>
    %55 = vector.shape_cast %54 : vector<2xf32> to vector<2x1xf32>
    %56 = arith.subf %41, %55 : vector<2x1xf32>
    %c8_i32 = arith.constant 8 : i32
    %57 = vector.broadcast %c8_i32 : i32 to vector<1x128xi32>
    %58 = arith.cmpi slt, %29, %57 : vector<1x128xi32>
    %59 = vector.shape_cast %58 : vector<1x128xi1> to vector<1x128xi1>
    %60 = vector.broadcast %59 : vector<1x128xi1> to vector<2x128xi1>
    %61 = vector.shape_cast %56 : vector<2x1xf32> to vector<2x1xf32>
    %62 = vector.broadcast %61 : vector<2x1xf32> to vector<2x128xf32>
    %63 = arith.select %60, %28, %62 : vector<2x128xi1>, vector<2x128xf32>
    %64 = vector.extract_strided_slice %63 {offsets = [0, 0], sizes = [2, 9], strides = [1, 1]} : vector<2x128xf32> to vector<2x9xf32>
    %c0_29 = arith.constant 0 : index
    %c0_30 = arith.constant 0 : index
    %65 = vector.load %arg9[%c0_29, %c0_30] : memref<2x9xf32, #tpu.memory_space<vmem>>, vector<2x9xf32>
    tpu.vector_store %arg9[%c0_29, %c0_30], %64 {strides = array<i32>} : memref<2x9xf32, #tpu.memory_space<vmem>>, vector<2x9xf32>,
    return
  }
  func.func @transform_0(%arg0: i32) -> (i32, i32) {
    %c0_i32 = arith.constant 0 : i32
    %c0_i32_0 = arith.constant 0 : i32
    return %arg0, %c0_i32 : i32, i32
  }
  func.func @transform_1(%arg0: i32) -> (i32, i32) {
    %c0_i32 = arith.constant 0 : i32
    %c0_i32_0 = arith.constant 0 : i32
    %c0_i32_1 = arith.constant 0 : i32
    return %c0_i32, %c0_i32_0 : i32, i32
  }
  func.func @transform_2(%arg0: i32) -> (i32, i32) {
    %c0_i32 = arith.constant 0 : i32
    %c0_i32_0 = arith.constant 0 : i32
    %c0_i32_1 = arith.constant 0 : i32
    return %c0_i32, %c0_i32_0 : i32, i32
  }
  func.func @transform_3(%arg0: i32) -> (i32, i32) {
    %c0_i32 = arith.constant 0 : i32
    %c0_i32_0 = arith.constant 0 : i32
    %c0_i32_1 = arith.constant 0 : i32
    return %c0_i32, %c0_i32_0 : i32, i32
  }
  func.func @transform_4(%arg0: i32) -> (i32, i32) {
    %c0_i32 = arith.constant 0 : i32
    %c0_i32_0 = arith.constant 0 : i32
    %c0_i32_1 = arith.constant 0 : i32
    return %c0_i32, %c0_i32_0 : i32, i32
  }
  func.func @transform_5(%arg0: i32) -> (i32, i32) {
    %c0_i32 = arith.constant 0 : i32
    %c0_i32_0 = arith.constant 0 : i32
    %c0_i32_1 = arith.constant 0 : i32
    return %c0_i32, %c0_i32_0 : i32, i32
  }
  func.func @transform_6(%arg0: i32) -> (i32, i32) {
    %c0_i32 = arith.constant 0 : i32
    %c0_i32_0 = arith.constant 0 : i32
    %c0_i32_1 = arith.constant 0 : i32
    return %c0_i32, %c0_i32_0 : i32, i32
  }
  func.func @transform_7(%arg0: i32) -> (i32, i32) {
    %c0_i32 = arith.constant 0 : i32
    %c0_i32_0 = arith.constant 0 : i32
    return %arg0, %c0_i32 : i32, i32
  }
  func.func @transform_8(%arg0: i32) -> (i32, i32) {
    %c0_i32 = arith.constant 0 : i32
    %c0_i32_0 = arith.constant 0 : i32
    return %arg0, %c0_i32 : i32, i32
  }
}

</mosaic_0001>

<llo_original>
// kernel: actor_net_forward.1
$region0: #{actor_net_forward.1}
  #allocation0 [shape = 'u32[]', space=smem, size = 0x4, offset = 0x4, fixed_abs, tag = 'smem constant byte address 0x4 - core index']
  #allocation1 [shape = 'u32[144,128]{1,0:T(1,128)}', space=vmem, size = 0x12000, scoped, tag = 'internal scratch']
  %s0 = inlined_call_operand.hbm [shape: f32[2,8], index: 0, kind: input, shape index: {}]
  %s1 = inlined_call_operand.vmem [shape: f32[8,64], index: 1, kind: input, shape index: {}]
  %s2 = inlined_call_operand.vmem [shape: f32[1,64], index: 2, kind: input, shape index: {}]
  %s3 = inlined_call_operand.hbm [shape: f32[64,64], index: 3, kind: input, shape index: {}]
  %s4 = inlined_call_operand.vmem [shape: f32[1,64], index: 4, kind: input, shape index: {}]
  %s5 = inlined_call_operand.hbm [shape: f32[64,256], index: 5, kind: input, shape index: {}]
  %s6 = inlined_call_operand.vmem [shape: f32[1,256], index: 6, kind: input, shape index: {}]
  %s7 = inlined_call_operand.vmem [shape: f32[2,4], index: 7, kind: input, shape index: {}]
  %s8 = inlined_call_operand.vmem [shape: f32[2,9], index: 8, kind: output, shape index: {}]
  %s9 = sld [smem:[#allocation0]]
  $region54: #{actor_net_forward.1} parent=0
    _
  %s11 = ssub.s32 1, %s9
  %s12 = scalar_select 0, %s11, %s9
  $region1: #{actor_net_forward.1} parent=0
    #allocation2 [shape = 'u8[1024]{0}', space=vmem, size = 0x400, scoped, tag = 'input window, operand 0, single buffered']
    #allocation3 [shape = 's32[1]{0}', space=sflag, size = 0x4, scoped, tag = 'scoped memory for actor_net_forward.1']
    #allocation4 [shape = 'u8[32768]{0}', space=vmem, size = 0x8000, scoped, tag = 'input window, operand 3, single buffered']
    #allocation5 [shape = 's32[1]{0}', space=sflag, size = 0x4, scoped, tag = 'scoped memory for actor_net_forward.1']
    #allocation6 [shape = 'u8[65536]{0}', space=vmem, size = 0x10000, scoped, tag = 'input window, operand 5, single buffered']
    %13 = vsyncpa [#allocation3], 0
    %14 = vsyncpa [#allocation5], 0
    // Predicated region
    $region2: #{actor_net_forward.1} parent=1 // pred_check
      _
    $region3: #{actor_net_forward.1} parent=1 // pred_check_branch
      %16 = sbr.rel (0) target = $region5
    $region4: #{actor_net_forward.1} parent=1 // pred_region
      %s18 = ssub.s32 32, 32
      %19 = vsyncadd [#allocation3], %s18
      %s21 = sshll.u32 [#allocation2], 4
      %s22 = int_to_ptr.vmem [resolvable:$true] %s21
      %24 = dma.hbm_to_vmem [thread:$0]  %s0, 32, %s22, [#allocation3]
    $region5: #{actor_net_forward.1} parent=1 // pred_fallthru
      _
    // Predicated region
    $region6: #{actor_net_forward.1} parent=1 // pred_check
      _
    $region7: #{actor_net_forward.1} parent=1 // pred_check_branch
      %26 = sbr.rel (0) target = $region9
    $region8: #{actor_net_forward.1} parent=1 // pred_region
      _
    $region9: #{actor_net_forward.1} parent=1 // pred_fallthru
      _
    // Predicated region
    $region10: #{actor_net_forward.1} parent=1 // pred_check
      _
    $region11: #{actor_net_forward.1} parent=1 // pred_check_branch
      %28 = sbr.rel (0) target = $region13
    $region12: #{actor_net_forward.1} parent=1 // pred_region
      _
    $region13: #{actor_net_forward.1} parent=1 // pred_fallthru
      _
    // Predicated region
    $region14: #{actor_net_forward.1} parent=1 // pred_check
      _
    $region15: #{actor_net_forward.1} parent=1 // pred_check_branch
      %30 = sbr.rel (0) target = $region17
    $region16: #{actor_net_forward.1} parent=1 // pred_region
      %s32 = ssub.s32 1024, 1024
      %33 = vsyncadd [#allocation5], %s32
      %s34 = sshll.u32 [#allocation4], 4
      %s35 = int_to_ptr.vmem [resolvable:$true] %s34
      %40 = dma.hbm_to_vmem [thread:$0]  %s3, 1024, %s35, [#allocation5], 128, 128, 8
    $region17: #{actor_net_forward.1} parent=1 // pred_fallthru
      _
    // Predicated region
    $region18: #{actor_net_forward.1} parent=1 // pred_check
      _
    $region19: #{actor_net_forward.1} parent=1 // pred_check_branch
      %42 = sbr.rel (0) target = $region21
    $region20: #{actor_net_forward.1} parent=1 // pred_region
      _
    $region21: #{actor_net_forward.1} parent=1 // pred_fallthru
      _
    // Predicated region
    $region22: #{actor_net_forward.1} parent=1 // pred_check
      _
    $region23: #{actor_net_forward.1} parent=1 // pred_check_branch
      %44 = sbr.rel (0) target = $region25
    $region24: #{actor_net_forward.1} parent=1 // pred_region
      %s46 = ssub.s32 2048, 2048
      %47 = vsyncadd [#allocation5], %s46
      %s48 = sshll.u32 [#allocation6], 4
      %s49 = int_to_ptr.vmem [resolvable:$true] %s48
      %54 = dma.hbm_to_vmem [thread:$0]  %s5, 2048, %s49, [#allocation5], 256, 256, 16
    $region25: #{actor_net_forward.1} parent=1 // pred_fallthru
      _
    // Predicated region
    $region26: #{actor_net_forward.1} parent=1 // pred_check
      _
    $region27: #{actor_net_forward.1} parent=1 // pred_check_branch
      %56 = sbr.rel (0) target = $region29
    $region28: #{actor_net_forward.1} parent=1 // pred_region
      _
    $region29: #{actor_net_forward.1} parent=1 // pred_fallthru
      _
    // Predicated region
    $region30: #{actor_net_forward.1} parent=1 // pred_check
      _
    $region31: #{actor_net_forward.1} parent=1 // pred_check_branch
      %58 = sbr.rel (0) target = $region33
    $region32: #{actor_net_forward.1} parent=1 // pred_region
      _
    $region33: #{actor_net_forward.1} parent=1 // pred_fallthru
      _
    // Predicated region
    $region34: #{actor_net_forward.1} parent=1 // pred_check
      _
    $region35: #{actor_net_forward.1} parent=1 // pred_check_branch
      %60 = sbr.rel (0) target = $region37
    $region36: #{actor_net_forward.1} parent=1 // pred_region
      %61 = dma.done [#allocation3], 32
    $region37: #{actor_net_forward.1} parent=1 // pred_fallthru
      _
    // Predicated region
    $region38: #{actor_net_forward.1} parent=1 // pred_check
      _
    $region39: #{actor_net_forward.1} parent=1 // pred_check_branch
      %63 = sbr.rel (0) target = $region41
    $region40: #{actor_net_forward.1} parent=1 // pred_region
      %64 = dma.done [#allocation5], 1024
    $region41: #{actor_net_forward.1} parent=1 // pred_fallthru
      _
    // Predicated region
    $region42: #{actor_net_forward.1} parent=1 // pred_check
      _
    $region43: #{actor_net_forward.1} parent=1 // pred_check_branch
      %66 = sbr.rel (0) target = $region45
    $region44: #{actor_net_forward.1} parent=1 // pred_region
      %67 = dma.done [#allocation5], 2048
    $region45: #{actor_net_forward.1} parent=1 // pred_fallthru
      _
    %v68 = vld [vmem:[#allocation2] sm:$0x3]
    %v69 = vld [vmem:[%s1] sm:$0xff]
    %v70 = vld [vmem:[%s2] sm:$0x1]
    %v72 = vlaneseq
    %v73 = vshrl.u32 %v72, 7
    %v74 = vsub.s32 0, %v73
    %v75 = vrot.slane %v70, %v74
    %vm77 = vcmask 64512
    %v79 = vsel %vm77, %v68, 0
    %81 = vmatprep.subr.mxu0 0.0
    %82 = vmatpush1.msra.mxu0 %v69
    %83 = vmatprep.subr.mxu0 0.0
    %84 = vmatpush1.msra.mxu0 0.0
    %85 = vmatprep.subr.mxu0 0.0
    %86 = vmatpush1.msra.mxu0 0.0
    %87 = vmatprep.subr.mxu0 0.0
    %88 = vmatpush1.msra.mxu0 0.0
    %89 = vmatprep.subr.mxu0 0.0
    %90 = vmatpush1.msra.mxu0 0.0
    %91 = vmatprep.subr.mxu0 0.0
    %92 = vmatpush1.msra.mxu0 0.0
    %93 = vmatprep.subr.mxu0 0.0
    %94 = vmatpush1.msra.mxu0 0.0
    %95 = vmatprep.subr.mxu0 0.0
    %96 = vmatpush1.msra.mxu0 0.0
    %97 = vmatprep.subr.mxu0 0.0
    %98 = vmatpush1.msra.mxu0 0.0
    %99 = vmatprep.subr.mxu0 0.0
    %100 = vmatpush1.msra.mxu0 0.0
    %101 = vmatprep.subr.mxu0 0.0
    %102 = vmatpush1.msra.mxu0 0.0
    %103 = vmatprep.subr.mxu0 0.0
    %104 = vmatpush1.msra.mxu0 0.0
    %105 = vmatprep.subr.mxu0 0.0
    %106 = vmatpush1.msra.mxu0 0.0
    %107 = vmatprep.subr.mxu0 0.0
    %108 = vmatpush1.msra.mxu0 0.0
    %109 = vmatprep.subr.mxu0 0.0
    %110 = vmatpush1.msra.mxu0 0.0
    %111 = vmatprep.subr.mxu0 0.0
    %112 = vmatpush1.msra.mxu0 0.0
    %113 = vmatprep.subr.mxu0 0.0
    %114 = vmatpush1.msra.mxu0 0.0
    %115 = vmatprep.subr.mxu0 0.0
    %116 = vmatpush1.msra.mxu0 0.0
    %117 = vmatprep.subr.mxu0 0.0
    %118 = vmatpush1.msra.mxu0 0.0
    %119 = vmatprep.subr.mxu0 0.0
    %120 = vmatpush1.msra.mxu0 0.0
    %121 = vmatprep.subr.mxu0 0.0
    %122 = vmatpush1.msra.mxu0 0.0
    %123 = vmatprep.subr.mxu0 0.0
    %124 = vmatpush1.msra.mxu0 0.0
    %125 = vmatprep.subr.mxu0 0.0
    %126 = vmatpush1.msra.mxu0 0.0
    %127 = vmatprep.subr.mxu0 0.0
    %128 = vmatpush1.msra.mxu0 0.0
    %129 = vmatprep.subr.mxu0 0.0
    %130 = vmatpush1.msra.mxu0 0.0
    %131 = vmatprep.subr.mxu0 0.0
    %132 = vmatpush1.msra.mxu0 0.0
    %133 = vmatprep.subr.mxu0 0.0
    %134 = vmatpush1.msra.mxu0 0.0
    %135 = vmatprep.subr.mxu0 0.0
    %136 = vmatpush1.msra.mxu0 0.0
    %137 = vmatprep.subr.mxu0 0.0
    %138 = vmatpush1.msra.mxu0 0.0
    %139 = vmatprep.subr.mxu0 0.0
    %140 = vmatpush1.msra.mxu0 0.0
    %141 = vmatprep.subr.mxu0 0.0
    %142 = vmatpush1.msra.mxu0 0.0
    %143 = vmatprep.subr.mxu0 0.0
    %144 = vmatpush1.msra.mxu0 0.0
    %145 = vmatprep.mubr.f32.mxu0 0.0
    %146 = vmatmul.mubr.f32.gmra.mrb[0].mxu0 %v79
    %v147 = vpop.f32.mrb[0].mxu0
    %v148 = vadd.f32 %v75, %v147
    %v149 = vpop.f32.mrb[0].mxu0
    %150 = vdwg.mxu0
    %v151 = vmax.f32 %v148, 0.0
    %v152 = vld [vmem:[#allocation4] sm:$0xff]
    %v153 = vld [vmem:[#allocation4 + $0x8] sm:$0xff]
    %v154 = vld [vmem:[#allocation4 + $0x10] sm:$0xff]
    %v155 = vld [vmem:[#allocation4 + $0x18] sm:$0xff]
    %v156 = vld [vmem:[#allocation4 + $0x20] sm:$0xff]
    %v157 = vld [vmem:[#allocation4 + $0x28] sm:$0xff]
    %v158 = vld [vmem:[#allocation4 + $0x30] sm:$0xff]
    %v159 = vld [vmem:[#allocation4 + $0x38] sm:$0xff]
    %v160 = vld [vmem:[%s4] sm:$0x1]
    %v162 = vlaneseq
    %v163 = vshrl.u32 %v162, 7
    %v164 = vsub.s32 0, %v163
    %v165 = vrot.slane %v160, %v164
    %vm167 = vcmask 523264
    %v169 = vsel %vm167, %v151, 0
    %171 = vmatprep.subr.mxu0 0.0
    %172 = vmatpush1.msra.mxu0 %v152
    %173 = vmatprep.subr.mxu0 0.0
    %174 = vmatpush1.msra.mxu0 %v153
    %175 = vmatprep.subr.mxu0 0.0
    %176 = vmatpush1.msra.mxu0 %v154
    %177 = vmatprep.subr.mxu0 0.0
    %178 = vmatpush1.msra.mxu0 %v155
    %179 = vmatprep.subr.mxu0 0.0
    %180 = vmatpush1.msra.mxu0 %v156
    %181 = vmatprep.subr.mxu0 0.0
    %182 = vmatpush1.msra.mxu0 %v157
    %183 = vmatprep.subr.mxu0 0.0
    %184 = vmatpush1.msra.mxu0 %v158
    %185 = vmatprep.subr.mxu0 0.0
    %186 = vmatpush1.msra.mxu0 %v159
    %187 = vmatprep.subr.mxu0 0.0
    %188 = vmatpush1.msra.mxu0 0.0
    %189 = vmatprep.subr.mxu0 0.0
    %190 = vmatpush1.msra.mxu0 0.0
    %191 = vmatprep.subr.mxu0 0.0
    %192 = vmatpush1.msra.mxu0 0.0
    %193 = vmatprep.subr.mxu0 0.0
    %194 = vmatpush1.msra.mxu0 0.0
    %195 = vmatprep.subr.mxu0 0.0
    %196 = vmatpush1.msra.mxu0 0.0
    %197 = vmatprep.subr.mxu0 0.0
    %198 = vmatpush1.msra.mxu0 0.0
    %199 = vmatprep.subr.mxu0 0.0
    %200 = vmatpush1.msra.mxu0 0.0
    %201 = vmatprep.subr.mxu0 0.0
    %202 = vmatpush1.msra.mxu0 0.0
    %203 = vmatprep.subr.mxu0 0.0
    %204 = vmatpush1.msra.mxu0 0.0
    %205 = vmatprep.subr.mxu0 0.0
    %206 = vmatpush1.msra.mxu0 0.0
    %207 = vmatprep.subr.mxu0 0.0
    %208 = vmatpush1.msra.mxu0 0.0
    %209 = vmatprep.subr.mxu0 0.0
    %210 = vmatpush1.msra.mxu0 0.0
    %211 = vmatprep.subr.mxu0 0.0
    %212 = vmatpush1.msra.mxu0 0.0
    %213 = vmatprep.subr.mxu0 0.0
    %214 = vmatpush1.msra.mxu0 0.0
    %215 = vmatprep.subr.mxu0 0.0
    %216 = vmatpush1.msra.mxu0 0.0
    %217 = vmatprep.subr.mxu0 0.0
    %218 = vmatpush1.msra.mxu0 0.0
    %219 = vmatprep.subr.mxu0 0.0
    %220 = vmatpush1.msra.mxu0 0.0
    %221 = vmatprep.subr.mxu0 0.0
    %222 = vmatpush1.msra.mxu0 0.0
    %223 = vmatprep.subr.mxu0 0.0
    %224 = vmatpush1.msra.mxu0 0.0
    %225 = vmatprep.subr.mxu0 0.0
    %226 = vmatpush1.msra.mxu0 0.0
    %227 = vmatprep.subr.mxu0 0.0
    %228 = vmatpush1.msra.mxu0 0.0
    %229 = vmatprep.subr.mxu0 0.0
    %230 = vmatpush1.msra.mxu0 0.0
    %231 = vmatprep.subr.mxu0 0.0
    %232 = vmatpush1.msra.mxu0 0.0
    %233 = vmatprep.subr.mxu0 0.0
    %234 = vmatpush1.msra.mxu0 0.0
    %235 = vmatprep.mubr.f32.mxu0 0.0
    %236 = vmatmul.mubr.f32.gmra.mrb[0].mxu0 %v169
    %v237 = vpop.f32.mrb[0].mxu0
    %v238 = vadd.f32 %v165, %v237
    %v239 = vpop.f32.mrb[0].mxu0
    %240 = vdwg.mxu0
    %v241 = vmax.f32 %v238, 0.0
    %v242 = vld [vmem:[#allocation6] sm:$0xff]
    %v243 = vld [vmem:[#allocation6 + $0x8] sm:$0xff]
    %v244 = vld [vmem:[#allocation6 + $0x10] sm:$0xff]
    %v245 = vld [vmem:[#allocation6 + $0x18] sm:$0xff]
    %v246 = vld [vmem:[#allocation6 + $0x20] sm:$0xff]
    %v247 = vld [vmem:[#allocation6 + $0x28] sm:$0xff]
    %v248 = vld [vmem:[#allocation6 + $0x30] sm:$0xff]
    %v249 = vld [vmem:[#allocation6 + $0x38] sm:$0xff]
    %v250 = vld [vmem:[#allocation6 + $0x40] sm:$0xff]
    %v251 = vld [vmem:[#allocation6 + $0x48] sm:$0xff]
    %v252 = vld [vmem:[#allocation6 + $0x50] sm:$0xff]
    %v253 = vld [vmem:[#allocation6 + $0x58] sm:$0xff]
    %v254 = vld [vmem:[#allocation6 + $0x60] sm:$0xff]
    %v255 = vld [vmem:[#allocation6 + $0x68] sm:$0xff]
    %v256 = vld [vmem:[#allocation6 + $0x70] sm:$0xff]
    %v257 = vld [vmem:[#allocation6 + $0x78] sm:$0xff]
    %v258 = vld [vmem:[%s6] sm:$0x3]
    %v260 = vlaneseq
    %v261 = vshrl.u32 %v260, 7
    %v262 = vsub.s32 0, %v261
    %v263 = vrot.slane %v258, %v262
    %v264 = vlaneseq
    %v265 = vshrl.u32 %v264, 7
    %v266 = vsub.s32 1, %v265
    %v267 = vrot.slane %v258, %v266
    %v271 = vsel %vm167, %v241, 0
    %273 = vmatprep.subr.mxu0 %v243
    %274 = vmatpush1.msra.mxu0 %v242
    %275 = vmatprep.subr.mxu0 %v245
    %276 = vmatpush1.msra.mxu0 %v244
    %277 = vmatprep.subr.mxu0 %v247
    %278 = vmatpush1.msra.mxu0 %v246
    %279 = vmatprep.subr.mxu0 %v249
    %280 = vmatpush1.msra.mxu0 %v248
    %281 = vmatprep.subr.mxu0 %v251
    %282 = vmatpush1.msra.mxu0 %v250
    %283 = vmatprep.subr.mxu0 %v253
    %284 = vmatpush1.msra.mxu0 %v252
    %285 = vmatprep.subr.mxu0 %v255
    %286 = vmatpush1.msra.mxu0 %v254
    %287 = vmatprep.subr.mxu0 %v257
    %288 = vmatpush1.msra.mxu0 %v256
    %289 = vmatprep.subr.mxu0 0.0
    %290 = vmatpush1.msra.mxu0 0.0
    %291 = vmatprep.subr.mxu0 0.0
    %292 = vmatpush1.msra.mxu0 0.0
    %293 = vmatprep.subr.mxu0 0.0
    %294 = vmatpush1.msra.mxu0 0.0
    %295 = vmatprep.subr.mxu0 0.0
    %296 = vmatpush1.msra.mxu0 0.0
    %297 = vmatprep.subr.mxu0 0.0
    %298 = vmatpush1.msra.mxu0 0.0
    %299 = vmatprep.subr.mxu0 0.0
    %300 = vmatpush1.msra.mxu0 0.0
    %301 = vmatprep.subr.mxu0 0.0
    %302 = vmatpush1.msra.mxu0 0.0
    %303 = vmatprep.subr.mxu0 0.0
    %304 = vmatpush1.msra.mxu0 0.0
    %305 = vmatprep.subr.mxu0 0.0
    %306 = vmatpush1.msra.mxu0 0.0
    %307 = vmatprep.subr.mxu0 0.0
    %308 = vmatpush1.msra.mxu0 0.0
    %309 = vmatprep.subr.mxu0 0.0
    %310 = vmatpush1.msra.mxu0 0.0
    %311 = vmatprep.subr.mxu0 0.0
    %312 = vmatpush1.msra.mxu0 0.0
    %313 = vmatprep.subr.mxu0 0.0
    %314 = vmatpush1.msra.mxu0 0.0
    %315 = vmatprep.subr.mxu0 0.0
    %316 = vmatpush1.msra.mxu0 0.0
    %317 = vmatprep.subr.mxu0 0.0
    %318 = vmatpush1.msra.mxu0 0.0
    %319 = vmatprep.subr.mxu0 0.0
    %320 = vmatpush1.msra.mxu0 0.0
    %321 = vmatprep.subr.mxu0 0.0
    %322 = vmatpush1.msra.mxu0 0.0
    %323 = vmatprep.subr.mxu0 0.0
    %324 = vmatpush1.msra.mxu0 0.0
    %325 = vmatprep.subr.mxu0 0.0
    %326 = vmatpush1.msra.mxu0 0.0
    %327 = vmatprep.subr.mxu0 0.0
    %328 = vmatpush1.msra.mxu0 0.0
    %329 = vmatprep.subr.mxu0 0.0
    %330 = vmatpush1.msra.mxu0 0.0
    %331 = vmatprep.subr.mxu0 0.0
    %332 = vmatpush1.msra.mxu0 0.0
    %333 = vmatprep.subr.mxu0 0.0
    %334 = vmatpush1.msra.mxu0 0.0
    %335 = vmatprep.subr.mxu0 0.0
    %336 = vmatpush1.msra.mxu0 0.0
    %337 = vmatprep.mubr.f32.mxu0 0.0
    %338 = vmatmul.mubr.f32.gmra.mrb[0].mxu0 %v271
    %v339 = vpop.f32.mrb[0].mxu0
    %v340 = vadd.f32 %v263, %v339
    %v341 = vpop.f32.mrb[0].mxu0
    %v342 = vadd.f32 %v267, %v341
    %343 = vdwg.mxu0
    %v344 = vld [vmem:[%s7] sm:$0x3]
    %vm345 = vcmask 31744
    %v346 = vsel %vm345, %v344, 0.0
    %v347 = vmul.f32 %v342, 1.442695
    %v348 = vpow.pop %v347
    %v349 = vmul.f32 %v348, %v346
    %v350 = vadd.f32 %v340, %v349
    %v351 = vtanh.pop %v350
    %v352 = vlaneseq
    %v353 = vand.u32 %v352, 127
    %vm354 = vcmask 1041408
    %v355 = vsel %vm354, %v342, 0.0
    %356 = vadd.xlane.f32.xlu0 %v355
    %v357 = vpop.xlane.xlu0 %356
    %v358 = vmul.f32 %v357, 2.0
    %v359 = vmul.f32 %v346, %v346
    %v360 = vsel %vm354, %v359, 0.0
    %361 = vadd.xlane.f32.xlu0 %v360
    %v362 = vpop.xlane.xlu0 %361
    %v363 = vadd.f32 %v358, %v362
    %v364 = vadd.f32 %v363, 7.351508
    %v365 = vmul.f32 %v364, -0.5
    %vm366 = vcmp.lt.s32.totalorder %v353, 4
    %v367 = vmul.f32 %v351, %v351
    %v368 = vsub.f32 1.0, %v367
    %v369 = vadd.f32 %v368, 1e-06
    %v370 = vlog2.pop %v369
    %v371 = vmul.f32 %v370, 0.6931472
    %v372 = vsel %vm366, 1, 0
    %vm373 = vcmp.eq.s32.totalorder %v372, 1
    %v374 = vsel %vm373, %v371, 0.0
    %v375 = vsel %vm354, %v374, 0.0
    %376 = vadd.xlane.f32.xlu0 %v375
    %v377 = vpop.xlane.xlu0 %376
    %v378 = vsub.f32 %v365, %v377
    %vm379 = vcmp.lt.s32.totalorder %v353, 8
    %v380 = vsel %vm379, 1, 0
    %vm381 = vcmp.eq.s32.totalorder %v380, 1
    %v382 = vsel %vm381, %v351, %v378
    %vm383 = vcmask 66560
    %384 = vst.msk [vmem:[%s8] sm:$0x3] %vm383, %v382
    // Predicated region
    $region46: #{actor_net_forward.1} parent=1 // pred_check
      _
    $region47: #{actor_net_forward.1} parent=1 // pred_check_branch
      %386 = sbr.rel (0) target = $region49
    $region48: #{actor_net_forward.1} parent=1 // pred_region
      _
    $region49: #{actor_net_forward.1} parent=1 // pred_fallthru
      _
    // Predicated region
    $region50: #{actor_net_forward.1} parent=1 // pred_check
      _
    $region51: #{actor_net_forward.1} parent=1 // pred_check_branch
      %388 = sbr.rel (0) target = $region53
    $region52: #{actor_net_forward.1} parent=1 // pred_region
      _
    $region53: #{actor_net_forward.1} parent=1 // pred_fallthru
      _
    %389 = vsyncpa [#allocation3], 1
    %390 = vsyncpa [#allocation5], 1

</llo_original>
